<compile_context>
chip_gen: v6e
topology: v6e:2x2x1
jax: 0.10.0
libtpu: 0.0.40
codegen_flags: <defaults>
</compile_context>

<pallas_src>
import functools

import jax
import jax.numpy as jnp
import numpy as np
from jax.experimental import pallas as pl
from jax.experimental.pallas import tpu as pltpu

_NEG_FILL = -1e30  # finite "minus infinity": exp underflows to 0, no NaN-producing arithmetic


def _unlikelihood_kernel(labels_ref, scores_ref, logits_ref, out_ref,
                         m_sc, l_sc, lab_sc,
                         *, score_threshold: float, clamp_min: float,
                         n_valid: int, vocab_size: int, tm: int, tv: int):
    i = pl.program_id(0)      # row-tile index
    vi = pl.program_id(1)     # vocab-tile index (innermost, reduction axis)

    @pl.when(vi == 0)
    def _init():
        m_sc[...] = jnp.full_like(m_sc, _NEG_FILL)
        l_sc[...] = jnp.zeros_like(l_sc)
        lab_sc[...] = jnp.zeros_like(lab_sc)

    # --- validity masks for the (possibly ragged) tile ---
    row = i * tm + jax.lax.broadcasted_iota(jnp.int32, (tm, 1), 0)     # (tm, 1)
    row_ok = row < n_valid
    col = vi * tv + jax.lax.broadcasted_iota(jnp.int32, (tm, tv), 1)   # (tm, tv)
    col_ok = col < vocab_size

    # --- sanitize BEFORE exp so out-of-bounds stale data can't inject NaN/Inf ---
    x = logits_ref[...].astype(jnp.float32)        # (tm, tv)
    x = jnp.where(col_ok, x, _NEG_FILL)            # OOB vocab cols -> -1e30 (exp -> 0)
    x = jnp.where(row_ok, x, 0.0)                  # OOB rows -> finite filler (masked later)

    # --- fused label-logit gather: one-hot select + lane reduce on the resident tile ---
    labels = labels_ref[...]                        # (tm, 1) int32
    lab_sc[...] += jnp.sum(jnp.where(col == labels, x, 0.0), axis=-1, keepdims=True)

    # --- online logsumexp over the vocab axis ---
    tile_max = jnp.max(x, axis=-1, keepdims=True)   # (tm, 1)
    m_new = jnp.maximum(m_sc[...], tile_max)
    l_sc[...] = (l_sc[...] * jnp.exp(m_sc[...] - m_new)
                 + jnp.sum(jnp.exp(x - m_new), axis=-1, keepdims=True))
    m_sc[...] = m_new

    @pl.when(vi == pl.num_programs(1) - 1)
    def _finalize():
        lse = m_sc[...] + jnp.log(l_sc[...])                         # (tm, 1)
        likelihoods = lab_sc[...] - lse                              # log p(label)
        one_minus_probs = jnp.maximum(1.0 - jnp.exp(likelihoods), clamp_min)
        unlikelihoods = jnp.log(one_minus_probs)

        scores = jnp.where(row_ok, scores_ref[...], 0.0)             # sanitize ragged rows
        if score_threshold:
            is_aligned = (scores <= score_threshold).astype(jnp.float32)
        else:
            is_aligned = 1.0 - scores

        valid = row_ok.astype(jnp.float32)
        ll_sum = jnp.sum(-(is_aligned * likelihoods) * valid)
        ull_sum = jnp.sum(-((1.0 - is_aligned) * unlikelihoods) * valid)
        aligned_sum = jnp.sum(is_aligned * valid)

        # lane-dense partial-sum output: lane0=ll, lane1=ull, lane2=aligned
        lane = jax.lax.broadcasted_iota(jnp.int32, (1, 1, 128), 2)
        sums = (jnp.where(lane == 0, ll_sum, 0.0)
                + jnp.where(lane == 1, ull_sum, 0.0)
                + jnp.where(lane == 2, aligned_sum, 0.0))
        out_ref[...] = jnp.broadcast_to(sums, out_ref.shape)         # (1, 8, 128)


def _choose_tiles(N: int, V: int, itemsize: int):
    """Generation-aware tile sizing: big tiles on v5e/v6e (128 MiB VMEM), tighter on v7x (64 MiB)."""
    try:
        cap = int(pltpu.get_tpu_info().vmem_capacity_bytes)
    except Exception:
        cap = 64 * 1024 * 1024
    vmem_limit = int(max(32 * 1024 * 1024,
                         min(cap * 0.75, cap - 16 * 1024 * 1024)))
    budget = vmem_limit - 4 * 1024 * 1024

    # vocab tile: full row for modest vocabularies, otherwise a lane-aligned slab
    tv = V if V <= 8192 else 4096

    # per-row VMEM: double-buffered input block + ~2 f32 temporaries per logit element
    per_row = tv * (2 * itemsize + 8) + 512
    tm = budget // per_row
    tm = int(max(8, min(1024, tm)))
    if N <= 8:
        tm = N
    else:
        tm = min(tm, N)
        tm = max(8, (tm // 8) * 8)
    return int(tm), int(tv), int(vmem_limit)


def unlikelihood_forward(logits, labels, token_scores,
                         *, score_threshold: float, alpha: float,
                         tm: int | None = None, tv: int | None = None):
    """Pallas implementation of Unlikelihood.forward.

    logits:       (N, V) float (f32 or bf16; bf16 halves the dominant HBM read traffic)
    labels:       (N,)   int   (flattened ground-truth ids)
    token_scores: (B, T+1) float, with B*T == N (shifted by 1, like the torch code)
    """
    token_scores_shifted = token_scores[..., 1:].reshape(-1)   # (N,)
    N, V = logits.shape
    assert token_scores_shifted.shape[0] == N

    labels_col = labels.reshape(N, 1).astype(jnp.int32)
    scores_col = token_scores_shifted.reshape(N, 1).astype(jnp.float32)

    itemsize = jnp.dtype(logits.dtype).itemsize
    auto_tm, auto_tv, vmem_limit = _choose_tiles(N, V, itemsize)
    if tm is None:
        tm = auto_tm
    if tv is None:
        tv = auto_tv
    if tv < V:
        assert tv % 128 == 0, "vocab tile must be lane-aligned when tiling the vocab axis"

    num_row_tiles = int(pl.cdiv(N, tm))
    num_vocab_tiles = int(pl.cdiv(V, tv))

    kernel = functools.partial(_unlikelihood_kernel,
                               score_threshold=float(score_threshold),
                               clamp_min=1e-20,
                               n_valid=N, vocab_size=V, tm=tm, tv=tv)

    partial_sums = pl.pallas_call(
        kernel,
        out_shape=jax.ShapeDtypeStruct((num_row_tiles, 8, 128), jnp.float32),
        grid_spec=pltpu.PrefetchScalarGridSpec(
            num_scalar_prefetch=0,
            grid=(num_row_tiles, num_vocab_tiles),
            in_specs=[
                pl.BlockSpec((tm, 1), lambda i, j: (i, 0)),      # labels
                pl.BlockSpec((tm, 1), lambda i, j: (i, 0)),      # token scores
                pl.BlockSpec((tm, tv), lambda i, j: (i, j)),     # logits (streamed)
            ],
            out_specs=pl.BlockSpec((1, 8, 128), lambda i, j: (i, 0, 0)),
            scratch_shapes=[pltpu.VMEM((tm, 1), jnp.float32),    # running max
                            pltpu.VMEM((tm, 1), jnp.float32),    # running sum
                            pltpu.VMEM((tm, 1), jnp.float32)],   # label-logit accumulator
        ),
        compiler_params=pltpu.CompilerParams(
            dimension_semantics=("parallel", "arbitrary"),
            vmem_limit_bytes=vmem_limit),
    )(labels_col, scores_col, logits)

    sums = partial_sums[:, 0, :]                     # (num_row_tiles, 128)
    n = jnp.float32(N)
    likelihood_loss = jnp.sum(sums[:, 0]) / n
    unlikelihood_loss = jnp.sum(sums[:, 1]) / n
    aligned_mean = jnp.sum(sums[:, 2]) / n

    loss = likelihood_loss + alpha * unlikelihood_loss
    logs = {
        "avg_token_score": jnp.mean(token_scores_shifted),
        "aligned_token_count": aligned_mean,
        "likelihood_loss": likelihood_loss,
        "unlikelihood_loss": unlikelihood_loss,
    }
    return loss, logs


def _reference_forward(logits, labels, token_scores, *, score_threshold, alpha):
    """Pure-JAX reference mirroring the PyTorch code (for correctness checks)."""
    ts = token_scores[..., 1:].reshape(-1)
    if score_threshold:
        aligned = (ts <= score_threshold).astype(jnp.float32)
    else:
        aligned = 1.0 - ts
    log_probs = jax.nn.log_softmax(logits.astype(jnp.float32), axis=-1)
    lik = jnp.take_along_axis(log_probs, labels.reshape(-1, 1), axis=1).reshape(-1)
    one_minus = jnp.maximum(1.0 - jnp.exp(lik), 1e-20)
    unlik = jnp.log(one_minus)
    ll = -(aligned * lik)
    ull = -((1.0 - aligned) * unlik)
    loss = jnp.mean(ll + alpha * ull)
    return loss, jnp.mean(ll), jnp.mean(ull), jnp.mean(aligned)


def _check(loss, logs, ref, rtol=1e-5, atol=1e-5):
    ref_loss, ref_ll, ref_ull, ref_aligned = ref
    np.testing.assert_allclose(np.asarray(loss), np.asarray(ref_loss), rtol=rtol, atol=atol)
    np.testing.assert_allclose(np.asarray(logs["likelihood_loss"]), np.asarray(ref_ll),
                               rtol=rtol, atol=atol)
    np.testing.assert_allclose(np.asarray(logs["unlikelihood_loss"]), np.asarray(ref_ull),
                               rtol=rtol, atol=atol)
    np.testing.assert_allclose(np.asarray(logs["aligned_token_count"]), np.asarray(ref_aligned),
                               rtol=rtol, atol=atol)


if __name__ == "__main__":
    key = jax.random.PRNGKey(0)

    # --- test 1: small shapes (batch=2, seq=8, vocab=128), auto tiling, f32 ---
    B, T, V = 2, 8, 128
    N = B * T
    score_threshold, alpha = 0.5, 1.0
    k1, k2, k3 = jax.random.split(key, 3)
    logits = jax.random.normal(k1, (N, V), dtype=jnp.float32)
    labels = jax.random.randint(k2, (N,), 0, V, dtype=jnp.int32)
    token_scores = jax.random.uniform(k3, (B, T + 1), dtype=jnp.float32)

    loss, logs = unlikelihood_forward(logits, labels, token_scores,
                                      score_threshold=score_threshold, alpha=alpha)
    jax.block_until_ready(loss)
    _check(loss, logs,
           _reference_forward(logits, labels, token_scores,
                              score_threshold=score_threshold, alpha=alpha))

    # --- test 1b: bf16 logits (HBM-traffic halving path), reference on the same bf16 values ---
    logits_bf16 = logits.astype(jnp.bfloat16)
    loss_b, logs_b = unlikelihood_forward(logits_bf16, labels, token_scores,
                                          score_threshold=score_threshold, alpha=alpha)
    jax.block_until_ready(loss_b)
    _check(loss_b, logs_b,
           _reference_forward(logits_bf16.astype(jnp.float32), labels, token_scores,
                              score_threshold=score_threshold, alpha=alpha),
           rtol=1e-4, atol=1e-4)

    # --- test 2: ragged row tiles + ragged vocab tiles + online-LSE path + threshold=0 branch ---
    B2, T2, V2 = 2, 9, 1152          # N=18 (not a multiple of tm=8); V=1152 vs tv=512 (ragged)
    N2 = B2 * T2
    k4, k5, k6 = jax.random.split(jax.random.PRNGKey(1), 3)
    logits2 = jax.random.normal(k4, (N2, V2), dtype=jnp.float32)
    labels2 = jax.random.randint(k5, (N2,), 0, V2, dtype=jnp.int32)
    token_scores2 = jax.random.uniform(k6, (B2, T2 + 1), dtype=jnp.float32)

    loss2, logs2 = unlikelihood_forward(logits2, labels2, token_scores2,
                                        score_threshold=0.0, alpha=0.7, tm=8, tv=512)
    jax.block_until_ready(loss2)
    _check(loss2, logs2,
           _reference_forward(logits2, labels2, token_scores2,
                              score_threshold=0.0, alpha=0.7))

    print("KERNEL_OK")
</pallas_src>

<mosaic_0001>
module attributes {stable_mosaic.version = 11 : i64} {
  func.func @_unlikelihood_kernel(%arg0: i32, %arg1: i32, %arg2: memref<16x1xi32, #tpu.memory_space<vmem>>, %arg3: memref<16x1xf32, #tpu.memory_space<vmem>>, %arg4: memref<16x128xf32, #tpu.memory_space<vmem>>, %arg5: memref<1x8x128xf32, #tpu.memory_space<vmem>>, %arg6: memref<16x1xf32, #tpu.memory_space<vmem>>, %arg7: memref<16x1xf32, #tpu.memory_space<vmem>>, %arg8: memref<16x1xf32, #tpu.memory_space<vmem>>) attributes {dimension_semantics = [#tpu.dimension_semantics<parallel>, #tpu.dimension_semantics<arbitrary>], iteration_bounds = array<i64: 1, 1>, scalar_prefetch = 0 : i64, scratch_operands = 3 : i64, tpu.core_type = #tpu.core_type<tc>, window_params = [{transform_indices = @transform_0, window_bounds = array<i64: 16, 1>}, {transform_indices = @transform_1, window_bounds = array<i64: 16, 1>}, {transform_indices = @transform_2, window_bounds = array<i64: 16, 128>}, {transform_indices = @transform_3, window_bounds = array<i64: 1, 8, 128>}]} {
    %c0_i32 = arith.constant 0 : i32
    %0 = arith.cmpi eq, %arg1, %c0_i32 : i32
    %1 = arith.extui %0 : i1 to i32
    %c0_i32_0 = arith.constant 0 : i32
    %2 = arith.cmpi ne, %1, %c0_i32_0 : i32
    scf.if %2 {
      %cst_27 = arith.constant -1.000000e+30 : f32
      %52 = vector.broadcast %cst_27 : f32 to vector<16x1xf32>
      %c0_28 = arith.constant 0 : index
      %c0_29 = arith.constant 0 : index
      %53 = vector.load %arg6[%c0_28, %c0_29] : memref<16x1xf32, #tpu.memory_space<vmem>>, vector<16x1xf32>
      tpu.vector_store %arg6[%c0_28, %c0_29], %52 {strides = array<i32>} : memref<16x1xf32, #tpu.memory_space<vmem>>, vector<16x1xf32>,
      %cst_30 = arith.constant 0.000000e+00 : f32
      %54 = vector.broadcast %cst_30 : f32 to vector<16x1xf32>
      %c0_31 = arith.constant 0 : index
      %c0_32 = arith.constant 0 : index
      %55 = vector.load %arg7[%c0_31, %c0_32] : memref<16x1xf32, #tpu.memory_space<vmem>>, vector<16x1xf32>
      tpu.vector_store %arg7[%c0_31, %c0_32], %54 {strides = array<i32>} : memref<16x1xf32, #tpu.memory_space<vmem>>, vector<16x1xf32>,
      %cst_33 = arith.constant 0.000000e+00 : f32
      %56 = vector.broadcast %cst_33 : f32 to vector<16x1xf32>
      %c0_34 = arith.constant 0 : index
      %c0_35 = arith.constant 0 : index
      %57 = vector.load %arg8[%c0_34, %c0_35] : memref<16x1xf32, #tpu.memory_space<vmem>>, vector<16x1xf32>
      tpu.vector_store %arg8[%c0_34, %c0_35], %56 {strides = array<i32>} : memref<16x1xf32, #tpu.memory_space<vmem>>, vector<16x1xf32>,
    } else {
    }
    %c16_i32 = arith.constant 16 : i32
    %3 = arith.muli %arg0, %c16_i32 : i32
    %4 = tpu.iota {dimensions = array<i32: 0>} : vector<16x1xi32>
    %5 = vector.broadcast %3 : i32 to vector<16x1xi32>
    %6 = arith.addi %5, %4 : vector<16x1xi32>
    %c16_i32_1 = arith.constant 16 : i32
    %7 = vector.broadcast %c16_i32_1 : i32 to vector<16x1xi32>
    %8 = arith.cmpi slt, %6, %7 : vector<16x1xi32>
    %c128_i32 = arith.constant 128 : i32
    %9 = arith.muli %arg1, %c128_i32 : i32
    %10 = tpu.iota {dimensions = array<i32: 1>} : vector<16x128xi32>
    %11 = vector.broadcast %9 : i32 to vector<16x128xi32>
    %12 = arith.addi %11, %10 : vector<16x128xi32>
    %c128_i32_2 = arith.constant 128 : i32
    %13 = vector.broadcast %c128_i32_2 : i32 to vector<16x128xi32>
    %14 = arith.cmpi slt, %12, %13 : vector<16x128xi32>
    %c0 = arith.constant 0 : index
    %c0_3 = arith.constant 0 : index
    %15 = vector.load %arg4[%c0, %c0_3] : memref<16x128xf32, #tpu.memory_space<vmem>>, vector<16x128xf32>
    %cst = arith.constant -1.000000e+30 : f32
    %16 = vector.broadcast %cst : f32 to vector<16x128xf32>
    %17 = arith.select %14, %15, %16 : vector<16x128xi1>, vector<16x128xf32>
    %cst_4 = arith.constant 0.000000e+00 : f32
    %18 = vector.shape_cast %8 : vector<16x1xi1> to vector<16x1xi1>
    %19 = vector.broadcast %18 : vector<16x1xi1> to vector<16x128xi1>
    %20 = vector.broadcast %cst_4 : f32 to vector<16x128xf32>
    %21 = arith.select %19, %17, %20 : vector<16x128xi1>, vector<16x128xf32>
    %c0_5 = arith.constant 0 : index
    %c0_6 = arith.constant 0 : index
    %22 = vector.load %arg2[%c0_5, %c0_6] : memref<16x1xi32, #tpu.memory_space<vmem>>, vector<16x1xi32>
    %c0_7 = arith.constant 0 : index
    %c0_8 = arith.constant 0 : index
    %23 = vector.load %arg8[%c0_7, %c0_8] : memref<16x1xf32, #tpu.memory_space<vmem>>, vector<16x1xf32>
    %24 = vector.broadcast %22 : vector<16x1xi32> to vector<16x128xi32>
    %25 = arith.cmpi eq, %12, %24 : vector<16x128xi32>
    %cst_9 = arith.constant 0.000000e+00 : f32
    %26 = vector.broadcast %cst_9 : f32 to vector<16x128xf32>
    %27 = arith.select %25, %21, %26 : vector<16x128xi1>, vector<16x128xf32>
    %cst_10 = arith.constant dense<0.000000e+00> : vector<16xf32>
    %28 = vector.multi_reduction <add>, %27, %cst_10 [1] : vector<16x128xf32> to vector<16xf32>
    %29 = vector.shape_cast %28 : vector<16xf32> to vector<16x1xf32>
    %30 = arith.addf %23, %29 : vector<16x1xf32>
    %c0_11 = arith.constant 0 : index
    %c0_12 = arith.constant 0 : index
    %31 = vector.load %arg8[%c0_11, %c0_12] : memref<16x1xf32, #tpu.memory_space<vmem>>, vector<16x1xf32>
    tpu.vector_store %arg8[%c0_11, %c0_12], %30 {strides = array<i32>} : memref<16x1xf32, #tpu.memory_space<vmem>>, vector<16x1xf32>,
    %cst_13 = arith.constant dense<0xFF800000> : vector<16xf32>
    %32 = vector.multi_reduction <maximumf>, %21, %cst_13 [1] : vector<16x128xf32> to vector<16xf32>
    %33 = vector.shape_cast %32 : vector<16xf32> to vector<16x1xf32>
    %c0_14 = arith.constant 0 : index
    %c0_15 = arith.constant 0 : index
    %34 = vector.load %arg6[%c0_14, %c0_15] : memref<16x1xf32, #tpu.memory_space<vmem>>, vector<16x1xf32>
    %35 = arith.maximumf %34, %33 : vector<16x1xf32>
    %c0_16 = arith.constant 0 : index
    %c0_17 = arith.constant 0 : index
    %36 = vector.load %arg7[%c0_16, %c0_17] : memref<16x1xf32, #tpu.memory_space<vmem>>, vector<16x1xf32>
    %c0_18 = arith.constant 0 : index
    %c0_19 = arith.constant 0 : index
    %37 = vector.load %arg6[%c0_18, %c0_19] : memref<16x1xf32, #tpu.memory_space<vmem>>, vector<16x1xf32>
    %38 = arith.subf %37, %35 : vector<16x1xf32>
    %39 = math.exp %38 : vector<16x1xf32>
    %40 = arith.mulf %36, %39 : vector<16x1xf32>
    %41 = vector.broadcast %35 : vector<16x1xf32> to vector<16x128xf32>
    %42 = arith.subf %21, %41 : vector<16x128xf32>
    %43 = math.exp %42 : vector<16x128xf32>
    %cst_20 = arith.constant dense<0.000000e+00> : vector<16xf32>
    %44 = vector.multi_reduction <add>, %43, %cst_20 [1] : vector<16x128xf32> to vector<16xf32>
    %45 = vector.shape_cast %44 : vector<16xf32> to vector<16x1xf32>
    %46 = arith.addf %40, %45 : vector<16x1xf32>
    %c0_21 = arith.constant 0 : index
    %c0_22 = arith.constant 0 : index
    %47 = vector.load %arg7[%c0_21, %c0_22] : memref<16x1xf32, #tpu.memory_space<vmem>>, vector<16x1xf32>
    tpu.vector_store %arg7[%c0_21, %c0_22], %46 {strides = array<i32>} : memref<16x1xf32, #tpu.memory_space<vmem>>, vector<16x1xf32>,
    %c0_23 = arith.constant 0 : index
    %c0_24 = arith.constant 0 : index
    %48 = vector.load %arg6[%c0_23, %c0_24] : memref<16x1xf32, #tpu.memory_space<vmem>>, vector<16x1xf32>
    tpu.vector_store %arg6[%c0_23, %c0_24], %35 {strides = array<i32>} : memref<16x1xf32, #tpu.memory_space<vmem>>, vector<16x1xf32>,
    %c0_i32_25 = arith.constant 0 : i32
    %49 = arith.cmpi eq, %arg1, %c0_i32_25 : i32
    %50 = arith.extui %49 : i1 to i32
    %c0_i32_26 = arith.constant 0 : i32
    %51 = arith.cmpi ne, %50, %c0_i32_26 : i32
    scf.if %51 {
      %c0_27 = arith.constant 0 : index
      %c0_28 = arith.constant 0 : index
      %52 = vector.load %arg6[%c0_27, %c0_28] : memref<16x1xf32, #tpu.memory_space<vmem>>, vector<16x1xf32>
      %c0_29 = arith.constant 0 : index
      %c0_30 = arith.constant 0 : index
      %53 = vector.load %arg7[%c0_29, %c0_30] : memref<16x1xf32, #tpu.memory_space<vmem>>, vector<16x1xf32>
      %54 = math.log %53 : vector<16x1xf32>
      %55 = arith.addf %52, %54 : vector<16x1xf32>
      %c0_31 = arith.constant 0 : index
      %c0_32 = arith.constant 0 : index
      %56 = vector.load %arg8[%c0_31, %c0_32] : memref<16x1xf32, #tpu.memory_space<vmem>>, vector<16x1xf32>
      %57 = arith.subf %56, %55 : vector<16x1xf32>
      %58 = math.exp %57 : vector<16x1xf32>
      %cst_33 = arith.constant 1.000000e+00 : f32
      %59 = vector.broadcast %cst_33 : f32 to vector<16x1xf32>
      %60 = arith.subf %59, %58 : vector<16x1xf32>
      %cst_34 = arith.constant 9.99999968E-21 : f32
      %61 = vector.broadcast %cst_34 : f32 to vector<16x1xf32>
      %62 = arith.maximumf %60, %61 : vector<16x1xf32>
      %63 = math.log %62 : vector<16x1xf32>
      %c0_35 = arith.constant 0 : index
      %c0_36 = arith.constant 0 : index
      %64 = vector.load %arg3[%c0_35, %c0_36] : memref<16x1xf32, #tpu.memory_space<vmem>>, vector<16x1xf32>
      %cst_37 = arith.constant 0.000000e+00 : f32
      %65 = vector.broadcast %cst_37 : f32 to vector<16x1xf32>
      %66 = arith.select %8, %64, %65 : vector<16x1xi1>, vector<16x1xf32>
      %cst_38 = arith.constant 5.000000e-01 : f32
      %67 = vector.broadcast %cst_38 : f32 to vector<16x1xf32>
      %68 = arith.cmpf ole, %66, %67 : vector<16x1xf32>
      %69 = arith.extui %68 : vector<16x1xi1> to vector<16x1xi32>
      %70 = arith.sitofp %69 : vector<16x1xi32> to vector<16x1xf32>
      %71 = arith.extui %8 : vector<16x1xi1> to vector<16x1xi32>
      %72 = arith.sitofp %71 : vector<16x1xi32> to vector<16x1xf32>
      %73 = arith.mulf %70, %57 : vector<16x1xf32>
      %cst_39 = arith.constant 0.000000e+00 : f32
      %74 = vector.broadcast %cst_39 : f32 to vector<16x1xf32>
      %75 = arith.subf %74, %73 : vector<16x1xf32>
      %76 = arith.mulf %75, %72 : vector<16x1xf32>
      %77 = vector.shape_cast %76 : vector<16x1xf32> to vector<1x16x1xf32>
      %cst_40 = arith.constant dense<0.000000e+00> : vector<1xf32>
      %78 = vector.multi_reduction <add>, %77, %cst_40 [1, 2] : vector<1x16x1xf32> to vector<1xf32>
      %79 = vector.shape_cast %78 : vector<1xf32> to vector<1x1x1xf32>
      %80 = vector.extract %79[0, 0, 0] : f32 from vector<1x1x1xf32>
      %cst_41 = arith.constant 1.000000e+00 : f32
      %81 = vector.broadcast %cst_41 : f32 to vector<16x1xf32>
      %82 = arith.subf %81, %70 : vector<16x1xf32>
      %83 = arith.mulf %82, %63 : vector<16x1xf32>
      %cst_42 = arith.constant 0.000000e+00 : f32
      %84 = vector.broadcast %cst_42 : f32 to vector<16x1xf32>
      %85 = arith.subf %84, %83 : vector<16x1xf32>
      %86 = arith.mulf %85, %72 : vector<16x1xf32>
      %87 = vector.shape_cast %86 : vector<16x1xf32> to vector<1x16x1xf32>
      %cst_43 = arith.constant dense<0.000000e+00> : vector<1xf32>
      %88 = vector.multi_reduction <add>, %87, %cst_43 [1, 2] : vector<1x16x1xf32> to vector<1xf32>
      %89 = vector.shape_cast %88 : vector<1xf32> to vector<1x1x1xf32>
      %90 = vector.extract %89[0, 0, 0] : f32 from vector<1x1x1xf32>
      %91 = arith.mulf %70, %72 : vector<16x1xf32>
      %92 = vector.shape_cast %91 : vector<16x1xf32> to vector<1x16x1xf32>
      %cst_44 = arith.constant dense<0.000000e+00> : vector<1xf32>
      %93 = vector.multi_reduction <add>, %92, %cst_44 [1, 2] : vector<1x16x1xf32> to vector<1xf32>
      %94 = vector.shape_cast %93 : vector<1xf32> to vector<1x1x1xf32>
      %95 = vector.extract %94[0, 0, 0] : f32 from vector<1x1x1xf32>
      %96 = tpu.iota {dimensions = array<i32: 2>} : vector<1x1x128xi32>
      %c0_i32_45 = arith.constant 0 : i32
      %97 = vector.broadcast %c0_i32_45 : i32 to vector<1x1x128xi32>
      %98 = arith.cmpi eq, %96, %97 : vector<1x1x128xi32>
      %cst_46 = arith.constant 0.000000e+00 : f32
      %99 = vector.broadcast %80 : f32 to vector<1x1x128xf32>
      %100 = vector.broadcast %cst_46 : f32 to vector<1x1x128xf32>
      %101 = arith.select %98, %99, %100 : vector<1x1x128xi1>, vector<1x1x128xf32>
      %c1_i32 = arith.constant 1 : i32
      %102 = vector.broadcast %c1_i32 : i32 to vector<1x1x128xi32>
      %103 = arith.cmpi eq, %96, %102 : vector<1x1x128xi32>
      %cst_47 = arith.constant 0.000000e+00 : f32
      %104 = vector.broadcast %90 : f32 to vector<1x1x128xf32>
      %105 = vector.broadcast %cst_47 : f32 to vector<1x1x128xf32>
      %106 = arith.select %103, %104, %105 : vector<1x1x128xi1>, vector<1x1x128xf32>
      %107 = arith.addf %101, %106 : vector<1x1x128xf32>
      %c2_i32 = arith.constant 2 : i32
      %108 = vector.broadcast %c2_i32 : i32 to vector<1x1x128xi32>
      %109 = arith.cmpi eq, %96, %108 : vector<1x1x128xi32>
      %cst_48 = arith.constant 0.000000e+00 : f32
      %110 = vector.broadcast %95 : f32 to vector<1x1x128xf32>
      %111 = vector.broadcast %cst_48 : f32 to vector<1x1x128xf32>
      %112 = arith.select %109, %110, %111 : vector<1x1x128xi1>, vector<1x1x128xf32>
      %113 = arith.addf %107, %112 : vector<1x1x128xf32>
      %114 = vector.shape_cast %113 : vector<1x1x128xf32> to vector<1x1x128xf32>
      %115 = vector.broadcast %114 : vector<1x1x128xf32> to vector<1x8x128xf32>
      %c0_49 = arith.constant 0 : index
      %c0_50 = arith.constant 0 : index
      %c0_51 = arith.constant 0 : index
      %116 = vector.load %arg5[%c0_49, %c0_50, %c0_51] : memref<1x8x128xf32, #tpu.memory_space<vmem>>, vector<1x8x128xf32>
      tpu.vector_store %arg5[%c0_49, %c0_50, %c0_51], %115 {strides = array<i32>} : memref<1x8x128xf32, #tpu.memory_space<vmem>>, vector<1x8x128xf32>,
    } else {
    }
    return
  }
  func.func @transform_0(%arg0: i32, %arg1: i32) -> (i32, i32) {
    %c0_i32 = arith.constant 0 : i32
    %c0_i32_0 = arith.constant 0 : i32
    return %arg0, %c0_i32 : i32, i32
  }
  func.func @transform_1(%arg0: i32, %arg1: i32) -> (i32, i32) {
    %c0_i32 = arith.constant 0 : i32
    %c0_i32_0 = arith.constant 0 : i32
    return %arg0, %c0_i32 : i32, i32
  }
  func.func @transform_2(%arg0: i32, %arg1: i32) -> (i32, i32) {
    %c0_i32 = arith.constant 0 : i32
    return %arg0, %arg1 : i32, i32
  }
  func.func @transform_3(%arg0: i32, %arg1: i32) -> (i32, i32, i32) {
    %c0_i32 = arith.constant 0 : i32
    %c0_i32_0 = arith.constant 0 : i32
    %c0_i32_1 = arith.constant 0 : i32
    return %arg0, %c0_i32, %c0_i32_0 : i32, i32, i32
  }
}

</mosaic_0001>

<llo_original>
// kernel: tpu_custom_call.1
$region0: #{tpu_custom_call.1}
  #allocation0 [shape = 'u32[]', space=smem, size = 0x4, offset = 0x4, fixed_abs, tag = 'smem constant byte address 0x4 - core index']
  #allocation1 [shape = 'u32[144,128]{1,0:T(1,128)}', space=vmem, size = 0x12000, scoped, tag = 'internal scratch']
  #allocation2 [shape = 'f32[16,1]{1,0:T(8,128)}', space=vmem, size = 0x2000, scoped, tag = 'scratch operand']
  #allocation3 [shape = 'f32[16,1]{1,0:T(8,128)}', space=vmem, size = 0x2000, scoped, tag = 'scratch operand']
  #allocation4 [shape = 'f32[16,1]{1,0:T(8,128)}', space=vmem, size = 0x2000, scoped, tag = 'scratch operand']
  %s0 = inlined_call_operand.vmem [shape: s32[16,1], index: 0, kind: input, shape index: {}]
  %s1 = inlined_call_operand.vmem [shape: f32[16,1], index: 1, kind: input, shape index: {}]
  %s2 = inlined_call_operand.vmem [shape: f32[16,128], index: 2, kind: input, shape index: {}]
  %s3 = inlined_call_operand.hbm [shape: f32[1,8,128], index: 3, kind: output, shape index: {}]
  %s4 = sld [smem:[#allocation0]]
  $region30: #{tpu_custom_call.1} parent=0
    _
  %s6 = ssub.s32 1, %s4
  %s7 = scalar_select 0, %s6, %s4
  $region1: #{tpu_custom_call.1} parent=0
    #allocation5 [shape = 'u8[4096]{0}', space=vmem, size = 0x1000, scoped, tag = 'output window, operand 0, single buffered']
    #allocation6 [shape = 's32[1]{0}', space=sflag, size = 0x4, scoped, tag = 'scoped memory for tpu_custom_call.1']
    %8 = vsyncpa [#allocation6], 0
    // Predicated region
    $region2: #{tpu_custom_call.1} parent=1 // pred_check
      _
    $region3: #{tpu_custom_call.1} parent=1 // pred_check_branch
      %10 = sbr.rel (0) target = $region5
    $region4: #{tpu_custom_call.1} parent=1 // pred_region
      _
    $region5: #{tpu_custom_call.1} parent=1 // pred_fallthru
      _
    // Predicated region
    $region6: #{tpu_custom_call.1} parent=1 // pred_check
      _
    $region7: #{tpu_custom_call.1} parent=1 // pred_check_branch
      %12 = sbr.rel (0) target = $region9
    $region8: #{tpu_custom_call.1} parent=1 // pred_region
      _
    $region9: #{tpu_custom_call.1} parent=1 // pred_fallthru
      _
    // Predicated region
    $region10: #{tpu_custom_call.1} parent=1 // pred_check
      _
    $region11: #{tpu_custom_call.1} parent=1 // pred_check_branch
      %14 = sbr.rel (0) target = $region13
    $region12: #{tpu_custom_call.1} parent=1 // pred_region
      _
    $region13: #{tpu_custom_call.1} parent=1 // pred_fallthru
      _
    %p15 = scmp.eq.s32.totalorder 0, 0
    // Predicated region
    $region14: #{tpu_custom_call.1} parent=1 // pred_check
      %p16 = pneg %p15
    $region15: #{tpu_custom_call.1} parent=1 // pred_check_branch
      %18 = sbr.rel (%p16) target = $region17
    $region16: #{tpu_custom_call.1} parent=1 // pred_region
      %vm19 = vcmask 7168
      %20 = vst.msk [vmem:[#allocation2] sm:$0xff] %vm19, -1e+30
      %21 = vst.msk [vmem:[#allocation2 + $0x8] sm:$0xff] %vm19, -1e+30
      %22 = vst.msk [vmem:[#allocation3] sm:$0xff] %vm19, 0.0
      %23 = vst.msk [vmem:[#allocation3 + $0x8] sm:$0xff] %vm19, 0.0
      %24 = vst.msk [vmem:[#allocation4] sm:$0xff] %vm19, 0.0
      %25 = vst.msk [vmem:[#allocation4 + $0x8] sm:$0xff] %vm19, 0.0
    $region17: #{tpu_custom_call.1} parent=1 // pred_fallthru
      _
    %s26 = smul.u32 0, 16
    %v27 = vlaneseq
    %v28 = vshrl.u32 %v27, 7
    %v29 = vadd.s32 %v28, 8
    %v30 = vstv %s26
    %v31 = vadd.s32 %v30, %v28
    %v32 = vadd.s32 %v30, %v29
    %vm33 = vcmp.lt.s32.totalorder %v31, 16
    %vm34 = vcmp.lt.s32.totalorder %v32, 16
    %s35 = smul.u32 0, 128
    %v36 = vlaneseq
    %v37 = vand.u32 %v36, 127
    %v38 = vstv %s35
    %v39 = vadd.s32 %v38, %v37
    %vm40 = vcmp.lt.s32.totalorder %v39, 128
    %v41 = vld [vmem:[%s2] sm:$0xff]
    %v42 = vld [vmem:[%s2 + $0x8] sm:$0xff]
    %v43 = vsel %vm40, %v41, -1e+30
    %v44 = vsel %vm40, %v42, -1e+30
    %v45 = vsel %vm33, 1, 0
    %v46 = vsel %vm34, 1, 0
    %vm47 = vcmp.eq.s32.totalorder %v45, 1
    %vm48 = vcmp.eq.s32.totalorder %v46, 1
    %v49 = vsel %vm47, %v43, 0.0
    %v50 = vsel %vm48, %v44, 0.0
    %v51 = vld [vmem:[%s0] sm:$0xff]
    %v52 = vld [vmem:[%s0 + $0x8] sm:$0xff]
    %v53 = vld [vmem:[#allocation4] sm:$0xff]
    %v54 = vld [vmem:[#allocation4 + $0x8] sm:$0xff]
    %55 = vset.pattern.permute.xlu0 0
    %56 = vperm.xlu0 %55, %v51
    %v57 = vpop.permute.xlu0 %56
    %58 = vset.pattern.permute.xlu0 0
    %59 = vperm.xlu0 %58, %v52
    %v60 = vpop.permute.xlu0 %59
    %vm61 = vcmp.eq.s32.totalorder %v39, %v57
    %vm62 = vcmp.eq.s32.totalorder %v39, %v60
    %v63 = vsel %vm61, %v49, 0.0
    %v64 = vsel %vm62, %v50, 0.0
    %65 = vadd.xlane.f32.xlu0 %v63
    %v66 = vpop.xlane.xlu0 %65
    %67 = vadd.xlane.f32.xlu0 %v64
    %v68 = vpop.xlane.xlu0 %67
    %v69 = vadd.f32 %v53, %v66
    %v70 = vadd.f32 %v54, %v68
    %vm71 = vcmask 7168
    %72 = vst.msk [vmem:[#allocation4] sm:$0xff] %vm71, %v69
    %73 = vst.msk [vmem:[#allocation4 + $0x8] sm:$0xff] %vm71, %v70
    %74 = vmax.xlane.f32.xlu0 %v49
    %v75 = vpop.xlane.xlu0 %74
    %76 = vmax.xlane.f32.xlu0 %v50
    %v77 = vpop.xlane.xlu0 %76
    %v78 = vld [vmem:[#allocation2] sm:$0xff]
    %v79 = vld [vmem:[#allocation2 + $0x8] sm:$0xff]
    %v80 = vmax.f32 %v78, %v75
    %v81 = vmax.f32 %v79, %v77
    %v82 = vld [vmem:[#allocation3] sm:$0xff]
    %v83 = vld [vmem:[#allocation3 + $0x8] sm:$0xff]
    %v84 = vsub.f32 %v78, %v80
    %v85 = vsub.f32 %v79, %v81
    %v86 = vmul.f32 %v84, 1.442695
    %v87 = vpow.pop %v86
    %v88 = vmul.f32 %v85, 1.442695
    %v89 = vpow.pop %v88
    %v90 = vmul.f32 %v82, %v87
    %v91 = vmul.f32 %v83, %v89
    %93 = vset.pattern.permute.xlu0 0
    %94 = vperm.xlu0 %93, %v80
    %v95 = vpop.permute.xlu0 %94
    %98 = vset.pattern.permute.xlu0 0
    %99 = vperm.xlu0 %98, %v81
    %v100 = vpop.permute.xlu0 %99
    %v102 = vsub.f32 %v49, %v95
    %v103 = vsub.f32 %v50, %v100
    %v104 = vmul.f32 %v102, 1.442695
    %v105 = vpow.pop %v104
    %v106 = vmul.f32 %v103, 1.442695
    %v107 = vpow.pop %v106
    %108 = vadd.xlane.f32.xlu0 %v105
    %v109 = vpop.xlane.xlu0 %108
    %110 = vadd.xlane.f32.xlu0 %v107
    %v111 = vpop.xlane.xlu0 %110
    %v112 = vadd.f32 %v90, %v109
    %v113 = vadd.f32 %v91, %v111
    %114 = vst.msk [vmem:[#allocation3] sm:$0xff] %vm71, %v112
    %115 = vst.msk [vmem:[#allocation3 + $0x8] sm:$0xff] %vm71, %v113
    %116 = vst.msk [vmem:[#allocation2] sm:$0xff] %vm71, %v80
    %117 = vst.msk [vmem:[#allocation2 + $0x8] sm:$0xff] %vm71, %v81
    // Predicated region
    $region18: #{tpu_custom_call.1} parent=1 // pred_check
      %p118 = pneg %p15
    $region19: #{tpu_custom_call.1} parent=1 // pred_check_branch
      %120 = sbr.rel (%p118) target = $region21
    $region20: #{tpu_custom_call.1} parent=1 // pred_region
      %v121 = vld [vmem:[#allocation2] sm:$0xff]
      %v122 = vld [vmem:[#allocation2 + $0x8] sm:$0xff]
      %v123 = vld [vmem:[#allocation3] sm:$0xff]
      %v124 = vld [vmem:[#allocation3 + $0x8] sm:$0xff]
      %v125 = vlog2.pop %v123
      %v126 = vmul.f32 %v125, 0.6931472
      %v127 = vlog2.pop %v124
      %v128 = vmul.f32 %v127, 0.6931472
      %v129 = vadd.f32 %v121, %v126
      %v130 = vadd.f32 %v122, %v128
      %v131 = vld [vmem:[#allocation4] sm:$0xff]
      %v132 = vld [vmem:[#allocation4 + $0x8] sm:$0xff]
      %v133 = vsub.f32 %v131, %v129
      %v134 = vsub.f32 %v132, %v130
      %v135 = vmul.f32 %v133, 1.442695
      %v136 = vpow.pop %v135
      %v137 = vmul.f32 %v134, 1.442695
      %v138 = vpow.pop %v137
      %v139 = vsub.f32 1.0, %v136
      %v140 = vsub.f32 1.0, %v138
      %v141 = vmax.f32 %v139, 1e-20
      %v142 = vmax.f32 %v140, 1e-20
      %v143 = vlog2.pop %v141
      %v144 = vmul.f32 %v143, 0.6931472
      %v145 = vlog2.pop %v142
      %v146 = vmul.f32 %v145, 0.6931472
      %v147 = vld [vmem:[%s1] sm:$0xff]
      %v148 = vld [vmem:[%s1 + $0x8] sm:$0xff]
      %v149 = vsel %vm33, %v147, 0.0
      %v150 = vsel %vm34, %v148, 0.0
      %vm151 = vcmp.le.f32.partialorder %v149, 0.5
      %vm152 = vcmp.le.f32.partialorder %v150, 0.5
      %v153 = vsel %vm151, 1, 0
      %v154 = vsel %vm152, 1, 0
      %v155 = vcvt.s32.f32 %v153
      %v156 = vcvt.s32.f32 %v154
      %v157 = vcvt.s32.f32 %v45
      %v158 = vcvt.s32.f32 %v46
      %v159 = vmul.f32 %v155, %v133
      %v160 = vmul.f32 %v156, %v134
      %v161 = vsub.f32 0.0, %v159
      %v162 = vsub.f32 0.0, %v160
      %v163 = vmul.f32 %v161, %v157
      %v164 = vmul.f32 %v162, %v158
      %v165 = vsel %vm71, %v163, 0.0
      %v166 = vsel %vm71, %v164, 0.0
      %v167 = vadd.f32 %v165, %v166
      %168 = vadd.xlane.f32.xlu0 %v167
      %v169 = vpop.xlane.xlu0 %168
      %v170 = vrot.slane %v169, 4
      %v171 = vadd.f32 %v169, %v170
      %v172 = vrot.slane %v171, 2
      %v173 = vadd.f32 %v171, %v172
      %v174 = vrot.slane %v173, 1
      %v175 = vadd.f32 %v173, %v174
      %s176 = vtos %v175
      %v177 = vsub.f32 1.0, %v155
      %v178 = vsub.f32 1.0, %v156
      %v179 = vmul.f32 %v177, %v144
      %v180 = vmul.f32 %v178, %v146
      %v181 = vsub.f32 0.0, %v179
      %v182 = vsub.f32 0.0, %v180
      %v183 = vmul.f32 %v181, %v157
      %v184 = vmul.f32 %v182, %v158
      %v185 = vsel %vm71, %v183, 0.0
      %v186 = vsel %vm71, %v184, 0.0
      %v187 = vadd.f32 %v185, %v186
      %188 = vadd.xlane.f32.xlu0 %v187
      %v189 = vpop.xlane.xlu0 %188
      %v190 = vrot.slane %v189, 4
      %v191 = vadd.f32 %v189, %v190
      %v192 = vrot.slane %v191, 2
      %v193 = vadd.f32 %v191, %v192
      %v194 = vrot.slane %v193, 1
      %v195 = vadd.f32 %v193, %v194
      %s196 = vtos %v195
      %v197 = vmul.f32 %v155, %v157
      %v198 = vmul.f32 %v156, %v158
      %v199 = vsel %vm71, %v197, 0.0
      %v200 = vsel %vm71, %v198, 0.0
      %v201 = vadd.f32 %v199, %v200
      %202 = vadd.xlane.f32.xlu0 %v201
      %v203 = vpop.xlane.xlu0 %202
      %v204 = vrot.slane %v203, 4
      %v205 = vadd.f32 %v203, %v204
      %v206 = vrot.slane %v205, 2
      %v207 = vadd.f32 %v205, %v206
      %v208 = vrot.slane %v207, 1
      %v209 = vadd.f32 %v207, %v208
      %s210 = vtos %v209
      %vm211 = vcmp.eq.s32.totalorder %v37, 0
      %v212 = vstv %s176
      %v213 = vsel %vm211, %v212, 0.0
      %vm214 = vcmp.eq.s32.totalorder %v37, 1
      %v215 = vstv %s196
      %v216 = vsel %vm214, %v215, 0.0
      %v217 = vadd.f32 %v213, %v216
      %vm218 = vcmp.eq.s32.totalorder %v37, 2
      %v219 = vstv %s210
      %v220 = vsel %vm218, %v219, 0.0
      %v221 = vadd.f32 %v217, %v220
      %222 = vst [vmem:[#allocation5] sm:$0xff] %v221
    $region21: #{tpu_custom_call.1} parent=1 // pred_fallthru
      _
    // Predicated region
    $region22: #{tpu_custom_call.1} parent=1 // pred_check
      _
    $region23: #{tpu_custom_call.1} parent=1 // pred_check_branch
      %224 = sbr.rel (0) target = $region25
    $region24: #{tpu_custom_call.1} parent=1 // pred_region
      %s226 = ssub.s32 128, 128
      %227 = vsyncadd [#allocation6], %s226
      %s229 = sshll.u32 [#allocation5], 4
      %s230 = int_to_ptr.vmem [resolvable:$true] %s229
      %232 = dma.vmem_to_hbm [thread:$0]  %s230, 128, %s3, [#allocation6]
    $region25: #{tpu_custom_call.1} parent=1 // pred_fallthru
      _
    // Predicated region
    $region26: #{tpu_custom_call.1} parent=1 // pred_check
      _
    $region27: #{tpu_custom_call.1} parent=1 // pred_check_branch
      %234 = sbr.rel (0) target = $region29
    $region28: #{tpu_custom_call.1} parent=1 // pred_region
      %235 = dma.done [#allocation6], 128
    $region29: #{tpu_custom_call.1} parent=1 // pred_fallthru
      _
    %236 = vsyncpa [#allocation6], 1

</llo_original>
